<compile_context>
chip_gen: v6e
topology: v6e:2x2x1
jax: 0.10.0
libtpu: 0.0.40
codegen_flags: <defaults>
</compile_context>

<pallas_src>
import functools

import jax
import jax.numpy as jnp
from jax import lax
from jax.experimental import pallas as pl
from jax.experimental.pallas import tpu as pltpu


def _round_up(n, m):
    return ((n + m - 1) // m) * m


def _hash_u32(x):
    # splitmix32-style mixer; uint32 arithmetic wraps mod 2^32.
    x = (x ^ (x >> 16)) * jnp.uint32(0x7FEB352D)
    x = (x ^ (x >> 15)) * jnp.uint32(0x846CA68B)
    x = x ^ (x >> 16)
    return x


def _ffn_kernel(seed_ref, x_ref, w1_ref, b1_ref, w2_ref, b2_ref, o_ref, acc_ref,
                *, keep_threshold, keep_scale, training, compute_dtype):
    # x_ref : (tm, hidden_p)      w1_ref: (hidden_p, tpf)   b1_ref: (1, tpf)
    # w2_ref: (tpf, hidden_p)     b2_ref: (1, hidden_p)
    # o_ref : (tm, hidden_p)      acc_ref: (tm, hidden_p) f32 scratch
    i = pl.program_id(0)            # row-tile axis ("parallel")
    j = pl.program_id(1)            # pf-chunk axis ("arbitrary" reduction)
    n_j = pl.num_programs(1)

    @pl.when(j == 0)
    def _():
        acc_ref[...] = jnp.zeros_like(acc_ref)

    # fc1 chunk: (tm, hidden) @ (hidden, tpf) -> f32 accumulation on the MXU.
    h = jnp.dot(x_ref[...], w1_ref[...], preferred_element_type=jnp.float32)
    h = h + b1_ref[...]
    h = jnp.maximum(h, 0.0)                                   # ReLU

    if training and keep_threshold > 0:
        # Inverted dropout via a counter-based hash; integer threshold compare
        # (no float convert).  Decorrelated per (row-tile, pf-chunk, element).
        tile_id = (i * n_j + j).astype(jnp.uint32)
        seed_mix = _hash_u32(seed_ref[0].astype(jnp.uint32)
                             + jnp.uint32(0x9E3779B9) * tile_id)
        rows = lax.broadcasted_iota(jnp.int32, h.shape, 0).astype(jnp.uint32)
        cols = lax.broadcasted_iota(jnp.int32, h.shape, 1).astype(jnp.uint32)
        counter = rows * jnp.uint32(h.shape[1]) + cols
        bits = _hash_u32(counter ^ seed_mix)
        keep = bits >= jnp.uint32(keep_threshold)
        h = jnp.where(keep, h * jnp.float32(keep_scale), 0.0)
    # Eval mode: nn.Dropout is the identity -> nothing to do.

    # fc2 chunk, accumulated into the resident f32 accumulator.
    acc_ref[...] += jnp.dot(h.astype(compute_dtype), w2_ref[...],
                            preferred_element_type=jnp.float32)

    @pl.when(j == n_j - 1)
    def _():
        o_ref[...] = (acc_ref[...] + b2_ref[...]).astype(o_ref.dtype)


def positionwise_ffn(x, w1, b1, w2, b2, *, dropout_ratio=0.0, training=False,
                     seed=0, compute_dtype=jnp.bfloat16, tm=None, tpf=None):
    """x: [..., hidden]; w1: [hidden, pf]; b1: [1, pf] or [pf];
       w2: [pf, hidden]; b2: [1, hidden] or [hidden].  Returns x's shape/dtype."""
    orig_shape = x.shape
    hidden = x.shape[-1]
    pf = w1.shape[1]
    x2 = x.reshape(-1, hidden)
    M = x2.shape[0]

    # Lane-dense padding: last dims to multiples of 128, rows to multiples of 8.
    hidden_p = _round_up(hidden, 128)
    pf_p = _round_up(pf, 128)

    # Tile plan: big row tile (fills the MXU, amortizes per-step overhead),
    # pf chunked so intermediates + streamed weight tiles fit a conservative
    # VMEM budget (safe for v5e's 16 MiB scoped default and v7x's 64 MiB).
    if tm is None:
        tm = min(256, _round_up(M, 8))
    if tpf is None:
        tpf = min(512, pf_p)

    w_bytes = jnp.dtype(compute_dtype).itemsize
    o_bytes = jnp.dtype(x.dtype).itemsize

    def _vmem_bytes(tm_, tpf_):
        return (2 * tm_ * hidden_p * w_bytes        # x tile (double-buffered)
                + 2 * hidden_p * tpf_ * w_bytes     # W1 chunk
                + 2 * tpf_ * hidden_p * w_bytes     # W2 chunk
                + 2 * tm_ * hidden_p * o_bytes      # output tile
                + tm_ * hidden_p * 4                # accumulator scratch
                + 4 * (tpf_ + hidden_p) * 4)        # bias tiles

    budget = 12 * 1024 * 1024
    while _vmem_bytes(tm, tpf) > budget and tpf > 128:
        tpf //= 2
    while _vmem_bytes(tm, tpf) > budget and tm > 8:
        tm //= 2

    M_p = _round_up(M, tm)
    pf_p = _round_up(pf_p, tpf)

    # Host-side padding + precision cast (bf16 weights halve HBM/VMEM traffic;
    # matmuls still accumulate in f32).  Biases stay f32.
    xp = jnp.zeros((M_p, hidden_p), compute_dtype).at[:M, :hidden].set(
        x2.astype(compute_dtype))
    w1p = jnp.zeros((hidden_p, pf_p), compute_dtype).at[:hidden, :pf].set(
        w1.astype(compute_dtype))
    w2p = jnp.zeros((pf_p, hidden_p), compute_dtype).at[:pf, :hidden].set(
        w2.astype(compute_dtype))
    b1p = jnp.zeros((1, pf_p), jnp.float32).at[:, :pf].set(
        b1.reshape(1, pf).astype(jnp.float32))
    b2p = jnp.zeros((1, hidden_p), jnp.float32).at[:, :hidden].set(
        b2.reshape(1, hidden).astype(jnp.float32))

    p = float(dropout_ratio)
    apply_dropout = bool(training) and p > 0.0
    if apply_dropout:
        keep_threshold = min(int(round(p * 2.0 ** 32)), 2 ** 32 - 1)
        keep_scale = 1.0 / (1.0 - p) if p < 1.0 else 0.0
    else:
        keep_threshold = 0
        keep_scale = 1.0

    kernel = functools.partial(_ffn_kernel,
                               keep_threshold=keep_threshold,
                               keep_scale=keep_scale,
                               training=apply_dropout,
                               compute_dtype=compute_dtype)

    out = pl.pallas_call(
        kernel,
        out_shape=jax.ShapeDtypeStruct((M_p, hidden_p), x.dtype),
        grid_spec=pltpu.PrefetchScalarGridSpec(
            num_scalar_prefetch=1,                       # seed -> SMEM
            grid=(M_p // tm, pf_p // tpf),
            in_specs=[
                pl.BlockSpec((tm, hidden_p),  lambda i, j, seed: (i, 0)),  # x tile
                pl.BlockSpec((hidden_p, tpf), lambda i, j, seed: (0, j)),  # W1 chunk
                pl.BlockSpec((1, tpf),        lambda i, j, seed: (0, j)),  # b1 chunk
                pl.BlockSpec((tpf, hidden_p), lambda i, j, seed: (j, 0)),  # W2 chunk
                pl.BlockSpec((1, hidden_p),   lambda i, j, seed: (0, 0)),  # b2
            ],
            out_specs=pl.BlockSpec((tm, hidden_p), lambda i, j, seed: (i, 0)),
            scratch_shapes=[pltpu.VMEM((tm, hidden_p), jnp.float32)],
        ),
        compiler_params=pltpu.CompilerParams(
            dimension_semantics=("parallel", "arbitrary")),
    )(jnp.array([seed], dtype=jnp.int32), xp, w1p, b1p, w2p, b2p)

    return out[:M, :hidden].reshape(orig_shape)


if __name__ == "__main__":
    # Small shapes consistent with the module: [batch, seq, hidden_dim]
    batch, seq, hidden_dim, pf_dim = 2, 8, 32, 64
    dropout_ratio = 0.1

    key = jax.random.PRNGKey(0)
    kx, k1, k2, k3, k4 = jax.random.split(key, 5)

    x  = jax.random.normal(kx, (batch, seq, hidden_dim), dtype=jnp.float32)
    # deterministic synthetic parameters (shapes from nn.Linear in __init__,
    # stored as [in, out] i.e. transposed vs. torch's [out, in])
    w1 = jax.random.normal(k1, (hidden_dim, pf_dim), dtype=jnp.float32) * 0.05
    b1 = jax.random.normal(k2, (1, pf_dim),          dtype=jnp.float32) * 0.05
    w2 = jax.random.normal(k3, (pf_dim, hidden_dim), dtype=jnp.float32) * 0.05
    b2 = jax.random.normal(k4, (1, hidden_dim),      dtype=jnp.float32) * 0.05

    ref = jnp.maximum(x @ w1 + b1, 0.0) @ w2 + b2

    # 1) Eval mode, full f32 compute: tight check vs. pure-JAX reference.
    out_f32 = positionwise_ffn(x, w1, b1, w2, b2,
                               dropout_ratio=dropout_ratio, training=False,
                               compute_dtype=jnp.float32)
    out_f32 = jax.block_until_ready(out_f32)
    assert out_f32.shape == x.shape
    assert jnp.allclose(out_f32, ref, atol=1e-4, rtol=1e-4), "f32 mismatch vs reference"

    # 2) Eval mode, default bf16 matmul inputs (f32 accumulation): loose check.
    out_bf16 = positionwise_ffn(x, w1, b1, w2, b2,
                                dropout_ratio=dropout_ratio, training=False)
    out_bf16 = jax.block_until_ready(out_bf16)
    assert jnp.allclose(out_bf16, ref, atol=5e-2, rtol=5e-2), "bf16 mismatch vs reference"

    # 3) Training mode: exercise the in-kernel dropout path.
    out_train = positionwise_ffn(x, w1, b1, w2, b2,
                                 dropout_ratio=dropout_ratio, training=True, seed=123)
    out_train = jax.block_until_ready(out_train)
    assert out_train.shape == x.shape
    assert bool(jnp.all(jnp.isfinite(out_train)))

    print("KERNEL_OK")
</pallas_src>

<mosaic_0001>
module attributes {stable_mosaic.version = 11 : i64} {
  func.func @_ffn_kernel(%arg0: i32, %arg1: i32, %arg2: memref<1xi32, #tpu.memory_space<smem>>, %arg3: memref<16x128xf32, #tpu.memory_space<vmem>>, %arg4: memref<128x128xf32, #tpu.memory_space<vmem>>, %arg5: memref<1x128xf32, #tpu.memory_space<vmem>>, %arg6: memref<128x128xf32, #tpu.memory_space<vmem>>, %arg7: memref<1x128xf32, #tpu.memory_space<vmem>>, %arg8: memref<16x128xf32, #tpu.memory_space<vmem>>, %arg9: memref<16x128xf32, #tpu.memory_space<vmem>>) attributes {dimension_semantics = [#tpu.dimension_semantics<parallel>, #tpu.dimension_semantics<arbitrary>], iteration_bounds = array<i64: 1, 1>, scalar_prefetch = 1 : i64, scratch_operands = 1 : i64, tpu.core_type = #tpu.core_type<tc>, window_params = [{transform_indices = @transform_0, window_bounds = array<i64: 16, 128>}, {transform_indices = @transform_1, window_bounds = array<i64: 128, 128>}, {transform_indices = @transform_2, window_bounds = array<i64: 1, 128>}, {transform_indices = @transform_3, window_bounds = array<i64: 128, 128>}, {pipeline_mode = #tpu.pipeline_mode<synchronous>, transform_indices = @transform_4, window_bounds = array<i64: 1, 128>}, {transform_indices = @transform_5, window_bounds = array<i64: 16, 128>}]} {
    %c0_i32 = arith.constant 0 : i32
    %0 = arith.cmpi eq, %arg1, %c0_i32 : i32
    %1 = arith.extui %0 : i1 to i32
    %c0_i32_0 = arith.constant 0 : i32
    %2 = arith.cmpi ne, %1, %c0_i32_0 : i32
    scf.if %2 {
      %cst_16 = arith.constant 0.000000e+00 : f32
      %19 = vector.broadcast %cst_16 : f32 to vector<16x128xf32>
      %c0_17 = arith.constant 0 : index
      %c0_18 = arith.constant 0 : index
      %20 = vector.load %arg9[%c0_17, %c0_18] : memref<16x128xf32, #tpu.memory_space<vmem>>, vector<16x128xf32>
      tpu.vector_store %arg9[%c0_17, %c0_18], %19 {strides = array<i32>} : memref<16x128xf32, #tpu.memory_space<vmem>>, vector<16x128xf32>,
    } else {
    }
    %c0 = arith.constant 0 : index
    %c0_1 = arith.constant 0 : index
    %3 = vector.load %arg3[%c0, %c0_1] : memref<16x128xf32, #tpu.memory_space<vmem>>, vector<16x128xf32>
    %c0_2 = arith.constant 0 : index
    %c0_3 = arith.constant 0 : index
    %4 = vector.load %arg4[%c0_2, %c0_3] : memref<128x128xf32, #tpu.memory_space<vmem>>, vector<128x128xf32>
    %cst = arith.constant dense<0.000000e+00> : vector<16x128xf32>
    %5 = tpu.matmul %3, %4, %cst {dimension_numbers = #tpu.dot_dimension_numbers<[1], [0], [0], [1], [0, 0, 1, 1], [], []>} : vector<16x128xf32>, vector<128x128xf32>, vector<16x128xf32> -> vector<16x128xf32>
    %c0_4 = arith.constant 0 : index
    %c0_5 = arith.constant 0 : index
    %6 = vector.load %arg5[%c0_4, %c0_5] : memref<1x128xf32, #tpu.memory_space<vmem>>, vector<1x128xf32>
    %7 = vector.broadcast %6 : vector<1x128xf32> to vector<16x128xf32>
    %8 = arith.addf %5, %7 : vector<16x128xf32>
    %cst_6 = arith.constant 0.000000e+00 : f32
    %9 = vector.broadcast %cst_6 : f32 to vector<16x128xf32>
    %10 = arith.maximumf %8, %9 : vector<16x128xf32>
    %c0_7 = arith.constant 0 : index
    %c0_8 = arith.constant 0 : index
    %11 = vector.load %arg9[%c0_7, %c0_8] : memref<16x128xf32, #tpu.memory_space<vmem>>, vector<16x128xf32>
    %c0_9 = arith.constant 0 : index
    %c0_10 = arith.constant 0 : index
    %12 = vector.load %arg6[%c0_9, %c0_10] : memref<128x128xf32, #tpu.memory_space<vmem>>, vector<128x128xf32>
    %cst_11 = arith.constant dense<0.000000e+00> : vector<16x128xf32>
    %13 = tpu.matmul %10, %12, %cst_11 {dimension_numbers = #tpu.dot_dimension_numbers<[1], [0], [0], [1], [0, 0, 1, 1], [], []>} : vector<16x128xf32>, vector<128x128xf32>, vector<16x128xf32> -> vector<16x128xf32>
    %14 = arith.addf %11, %13 : vector<16x128xf32>
    %c0_12 = arith.constant 0 : index
    %c0_13 = arith.constant 0 : index
    %15 = vector.load %arg9[%c0_12, %c0_13] : memref<16x128xf32, #tpu.memory_space<vmem>>, vector<16x128xf32>
    tpu.vector_store %arg9[%c0_12, %c0_13], %14 {strides = array<i32>} : memref<16x128xf32, #tpu.memory_space<vmem>>, vector<16x128xf32>,
    %c0_i32_14 = arith.constant 0 : i32
    %16 = arith.cmpi eq, %arg1, %c0_i32_14 : i32
    %17 = arith.extui %16 : i1 to i32
    %c0_i32_15 = arith.constant 0 : i32
    %18 = arith.cmpi ne, %17, %c0_i32_15 : i32
    scf.if %18 {
      %c0_16 = arith.constant 0 : index
      %c0_17 = arith.constant 0 : index
      %19 = vector.load %arg9[%c0_16, %c0_17] : memref<16x128xf32, #tpu.memory_space<vmem>>, vector<16x128xf32>
      %c0_18 = arith.constant 0 : index
      %c0_19 = arith.constant 0 : index
      %20 = vector.load %arg7[%c0_18, %c0_19] : memref<1x128xf32, #tpu.memory_space<vmem>>, vector<1x128xf32>
      %21 = vector.broadcast %20 : vector<1x128xf32> to vector<16x128xf32>
      %22 = arith.addf %19, %21 : vector<16x128xf32>
      %c0_20 = arith.constant 0 : index
      %c0_21 = arith.constant 0 : index
      %23 = vector.load %arg8[%c0_20, %c0_21] : memref<16x128xf32, #tpu.memory_space<vmem>>, vector<16x128xf32>
      tpu.vector_store %arg8[%c0_20, %c0_21], %22 {strides = array<i32>} : memref<16x128xf32, #tpu.memory_space<vmem>>, vector<16x128xf32>,
    } else {
    }
    return
  }
  func.func @transform_0(%arg0: i32, %arg1: i32, %arg2: memref<1xi32, #tpu.memory_space<smem>>) -> (i32, i32) {
    %c0_i32 = arith.constant 0 : i32
    %c0_i32_0 = arith.constant 0 : i32
    return %arg0, %c0_i32 : i32, i32
  }
  func.func @transform_1(%arg0: i32, %arg1: i32, %arg2: memref<1xi32, #tpu.memory_space<smem>>) -> (i32, i32) {
    %c0_i32 = arith.constant 0 : i32
    %c0_i32_0 = arith.constant 0 : i32
    return %c0_i32, %arg1 : i32, i32
  }
  func.func @transform_2(%arg0: i32, %arg1: i32, %arg2: memref<1xi32, #tpu.memory_space<smem>>) -> (i32, i32) {
    %c0_i32 = arith.constant 0 : i32
    %c0_i32_0 = arith.constant 0 : i32
    return %c0_i32, %arg1 : i32, i32
  }
  func.func @transform_3(%arg0: i32, %arg1: i32, %arg2: memref<1xi32, #tpu.memory_space<smem>>) -> (i32, i32) {
    %c0_i32 = arith.constant 0 : i32
    %c0_i32_0 = arith.constant 0 : i32
    return %arg1, %c0_i32 : i32, i32
  }
  func.func @transform_4(%arg0: i32, %arg1: i32, %arg2: memref<1xi32, #tpu.memory_space<smem>>) -> (i32, i32) {
    %c0_i32 = arith.constant 0 : i32
    %c0_i32_0 = arith.constant 0 : i32
    %c0_i32_1 = arith.constant 0 : i32
    return %c0_i32, %c0_i32_0 : i32, i32
  }
  func.func @transform_5(%arg0: i32, %arg1: i32, %arg2: memref<1xi32, #tpu.memory_space<smem>>) -> (i32, i32) {
    %c0_i32 = arith.constant 0 : i32
    %c0_i32_0 = arith.constant 0 : i32
    return %arg0, %c0_i32 : i32, i32
  }
}

</mosaic_0001>

<llo_original>
// kernel: tpu_custom_call.1
$region0: #{tpu_custom_call.1}
  #allocation0 [shape = 'u32[]', space=smem, size = 0x4, offset = 0x4, fixed_abs, tag = 'smem constant byte address 0x4 - core index']
  #allocation1 [shape = 'u32[144,128]{1,0:T(1,128)}', space=vmem, size = 0x12000, scoped, tag = 'internal scratch']
  #allocation2 [shape = 'f32[16,128]{1,0:T(8,128)}', space=vmem, size = 0x2000, scoped, tag = 'scratch operand']
  #allocation3 [shape = 's32[1]{0}', space=sflag, size = 0x4, scoped, tag = 'scoped memory for tpu_custom_call.1']
  #allocation4 [shape = 's32[1]{0:T(128)S(6)}', space=smem, size = 0x200, scoped, tag = 'prefetched SMEM operand 0']
  %s0 = inlined_call_operand.<no memory space> [shape: s32[1], index: 0, kind: input, shape index: {}]
  %s1 = inlined_call_operand.hbm [shape: f32[16,128], index: 1, kind: input, shape index: {}]
  %s2 = inlined_call_operand.hbm [shape: f32[128,128], index: 2, kind: input, shape index: {}]
  %s3 = inlined_call_operand.vmem [shape: f32[1,128], index: 3, kind: input, shape index: {}]
  %s4 = inlined_call_operand.hbm [shape: f32[128,128], index: 4, kind: input, shape index: {}]
  %s5 = inlined_call_operand.vmem [shape: f32[1,128], index: 5, kind: input, shape index: {}]
  %s6 = inlined_call_operand.hbm [shape: f32[16,128], index: 6, kind: output, shape index: {}]
  %s7 = sld [smem:[#allocation0]]
  $region50: #{tpu_custom_call.1} parent=0
    _
  %s9 = ssub.s32 1, %s7
  %s10 = scalar_select 0, %s9, %s7
  %11 = sst [smem:[#allocation4]] %s0
  $region1: #{tpu_custom_call.1} parent=0
    #allocation5 [shape = 'u8[8192]{0}', space=vmem, size = 0x2000, scoped, tag = 'input window, operand 1, single buffered']
    #allocation6 [shape = 's32[1]{0}', space=sflag, size = 0x4, scoped, tag = 'scoped memory for tpu_custom_call.1']
    #allocation7 [shape = 's32[1]{0}', space=sflag, size = 0x4, scoped, tag = 'scoped memory for tpu_custom_call.1']
    #allocation8 [shape = 'u8[65536]{0}', space=vmem, size = 0x10000, scoped, tag = 'input window, operand 2, single buffered']
    #allocation9 [shape = 's32[1]{0}', space=sflag, size = 0x4, scoped, tag = 'scoped memory for tpu_custom_call.1']
    #allocation10 [shape = 'u8[65536]{0}', space=vmem, size = 0x10000, scoped, tag = 'input window, operand 4, single buffered']
    #allocation11 [shape = 'u8[8192]{0}', space=vmem, size = 0x2000, scoped, tag = 'output window, operand 0, single buffered']
    %12 = vsyncpa [#allocation6], 0
    %13 = vsyncpa [#allocation9], 0
    %14 = vsyncpa [#allocation7], 0
    // Predicated region
    $region2: #{tpu_custom_call.1} parent=1 // pred_check
      _
    $region3: #{tpu_custom_call.1} parent=1 // pred_check_branch
      %16 = sbr.rel (0) target = $region5
    $region4: #{tpu_custom_call.1} parent=1 // pred_region
      %s18 = ssub.s32 256, 256
      %19 = vsyncadd [#allocation6], %s18
      %s20 = sshll.u32 [#allocation5], 4
      %s21 = int_to_ptr.vmem [resolvable:$true] %s20
      %26 = dma.hbm_to_vmem [thread:$0]  %s1, 256, %s21, [#allocation6], 128, 128, 8
    $region5: #{tpu_custom_call.1} parent=1 // pred_fallthru
      _
    // Predicated region
    $region6: #{tpu_custom_call.1} parent=1 // pred_check
      _
    $region7: #{tpu_custom_call.1} parent=1 // pred_check_branch
      %28 = sbr.rel (0) target = $region9
    $region8: #{tpu_custom_call.1} parent=1 // pred_region
      %s30 = ssub.s32 2048, 2048
      %31 = vsyncadd [#allocation9], %s30
      %s32 = sshll.u32 [#allocation8], 4
      %s33 = int_to_ptr.vmem [resolvable:$true] %s32
      %38 = dma.hbm_to_vmem [thread:$0]  %s2, 2048, %s33, [#allocation9], 128, 128, 8
    $region9: #{tpu_custom_call.1} parent=1 // pred_fallthru
      _
    // Predicated region
    $region10: #{tpu_custom_call.1} parent=1 // pred_check
      _
    $region11: #{tpu_custom_call.1} parent=1 // pred_check_branch
      %40 = sbr.rel (0) target = $region13
    $region12: #{tpu_custom_call.1} parent=1 // pred_region
      _
    $region13: #{tpu_custom_call.1} parent=1 // pred_fallthru
      _
    // Predicated region
    $region14: #{tpu_custom_call.1} parent=1 // pred_check
      _
    $region15: #{tpu_custom_call.1} parent=1 // pred_check_branch
      %42 = sbr.rel (0) target = $region17
    $region16: #{tpu_custom_call.1} parent=1 // pred_region
      %s44 = ssub.s32 2048, 2048
      %45 = vsyncadd [#allocation9], %s44
      %s46 = sshll.u32 [#allocation10], 4
      %s47 = int_to_ptr.vmem [resolvable:$true] %s46
      %52 = dma.hbm_to_vmem [thread:$0]  %s4, 2048, %s47, [#allocation9], 128, 128, 8
    $region17: #{tpu_custom_call.1} parent=1 // pred_fallthru
      _
    // Predicated region
    $region18: #{tpu_custom_call.1} parent=1 // pred_check
      _
    $region19: #{tpu_custom_call.1} parent=1 // pred_check_branch
      %54 = sbr.rel (0) target = $region21
    $region20: #{tpu_custom_call.1} parent=1 // pred_region
      _
    $region21: #{tpu_custom_call.1} parent=1 // pred_fallthru
      _
    // Predicated region
    $region22: #{tpu_custom_call.1} parent=1 // pred_check
      _
    $region23: #{tpu_custom_call.1} parent=1 // pred_check_branch
      %56 = sbr.rel (0) target = $region25
    $region24: #{tpu_custom_call.1} parent=1 // pred_region
      %57 = dma.done [#allocation6], 256
    $region25: #{tpu_custom_call.1} parent=1 // pred_fallthru
      _
    // Predicated region
    $region26: #{tpu_custom_call.1} parent=1 // pred_check
      _
    $region27: #{tpu_custom_call.1} parent=1 // pred_check_branch
      %59 = sbr.rel (0) target = $region29
    $region28: #{tpu_custom_call.1} parent=1 // pred_region
      %60 = dma.done [#allocation9], 2048
    $region29: #{tpu_custom_call.1} parent=1 // pred_fallthru
      _
    // Predicated region
    $region30: #{tpu_custom_call.1} parent=1 // pred_check
      _
    $region31: #{tpu_custom_call.1} parent=1 // pred_check_branch
      %62 = sbr.rel (0) target = $region33
    $region32: #{tpu_custom_call.1} parent=1 // pred_region
      %63 = dma.done [#allocation9], 2048
    $region33: #{tpu_custom_call.1} parent=1 // pred_fallthru
      _
    %p64 = scmp.eq.s32.totalorder 0, 0
    // Predicated region
    $region34: #{tpu_custom_call.1} parent=1 // pred_check
      %p65 = pneg %p64
    $region35: #{tpu_custom_call.1} parent=1 // pred_check_branch
      %67 = sbr.rel (%p65) target = $region37
    $region36: #{tpu_custom_call.1} parent=1 // pred_region
      %68 = vst [vmem:[#allocation2] sm:$0xff] 0.0
      %69 = vst [vmem:[#allocation2 + $0x8] sm:$0xff] 0.0
    $region37: #{tpu_custom_call.1} parent=1 // pred_fallthru
      _
    %v70 = vld [vmem:[#allocation5] sm:$0xff]
    %v71 = vld [vmem:[#allocation5 + $0x8] sm:$0xff]
    %v72 = vld [vmem:[#allocation8] sm:$0xff]
    %v73 = vld [vmem:[#allocation8 + $0x8] sm:$0xff]
    %v74 = vld [vmem:[#allocation8 + $0x10] sm:$0xff]
    %v75 = vld [vmem:[#allocation8 + $0x18] sm:$0xff]
    %v76 = vld [vmem:[#allocation8 + $0x20] sm:$0xff]
    %v77 = vld [vmem:[#allocation8 + $0x28] sm:$0xff]
    %v78 = vld [vmem:[#allocation8 + $0x30] sm:$0xff]
    %v79 = vld [vmem:[#allocation8 + $0x38] sm:$0xff]
    %v80 = vld [vmem:[#allocation8 + $0x40] sm:$0xff]
    %v81 = vld [vmem:[#allocation8 + $0x48] sm:$0xff]
    %v82 = vld [vmem:[#allocation8 + $0x50] sm:$0xff]
    %v83 = vld [vmem:[#allocation8 + $0x58] sm:$0xff]
    %v84 = vld [vmem:[#allocation8 + $0x60] sm:$0xff]
    %v85 = vld [vmem:[#allocation8 + $0x68] sm:$0xff]
    %v86 = vld [vmem:[#allocation8 + $0x70] sm:$0xff]
    %v87 = vld [vmem:[#allocation8 + $0x78] sm:$0xff]
    %v88 = vld [vmem:[%s3] sm:$0x1]
    %v90 = vlaneseq
    %v91 = vshrl.u32 %v90, 7
    %v92 = vsub.s32 0, %v91
    %v93 = vrot.slane %v88, %v92
    %95 = vmatprep.subr.mxu0 0.0
    %96 = vmatpush1.msra.mxu0 %v87
    %97 = vmatprep.subr.mxu0 0.0
    %98 = vmatpush1.msra.mxu0 %v86
    %99 = vmatprep.subr.mxu0 0.0
    %100 = vmatpush1.msra.mxu0 %v85
    %101 = vmatprep.subr.mxu0 0.0
    %102 = vmatpush1.msra.mxu0 %v84
    %103 = vmatprep.subr.mxu0 0.0
    %104 = vmatpush1.msra.mxu0 %v83
    %105 = vmatprep.subr.mxu0 0.0
    %106 = vmatpush1.msra.mxu0 %v82
    %107 = vmatprep.subr.mxu0 0.0
    %108 = vmatpush1.msra.mxu0 %v81
    %109 = vmatprep.subr.mxu0 0.0
    %110 = vmatpush1.msra.mxu0 %v80
    %111 = vmatprep.subr.mxu0 0.0
    %112 = vmatpush1.msra.mxu0 %v79
    %113 = vmatprep.subr.mxu0 0.0
    %114 = vmatpush1.msra.mxu0 %v78
    %115 = vmatprep.subr.mxu0 0.0
    %116 = vmatpush1.msra.mxu0 %v77
    %117 = vmatprep.subr.mxu0 0.0
    %118 = vmatpush1.msra.mxu0 %v76
    %119 = vmatprep.subr.mxu0 0.0
    %120 = vmatpush1.msra.mxu0 %v75
    %121 = vmatprep.subr.mxu0 0.0
    %122 = vmatpush1.msra.mxu0 %v74
    %123 = vmatprep.subr.mxu0 0.0
    %124 = vmatpush1.msra.mxu0 %v73
    %125 = vmatprep.subr.mxu0 0.0
    %126 = vmatpush1.msra.mxu0 %v72
    %127 = vmatprep.subr.mxu0 0.0
    %128 = vmatpush2.msra.mxu0 0.0
    %129 = vmatprep.subr.mxu0 0.0
    %130 = vmatpush2.msra.mxu0 0.0
    %131 = vmatprep.subr.mxu0 0.0
    %132 = vmatpush2.msra.mxu0 0.0
    %133 = vmatprep.subr.mxu0 0.0
    %134 = vmatpush2.msra.mxu0 0.0
    %135 = vmatprep.subr.mxu0 0.0
    %136 = vmatpush2.msra.mxu0 0.0
    %137 = vmatprep.subr.mxu0 0.0
    %138 = vmatpush2.msra.mxu0 0.0
    %139 = vmatprep.subr.mxu0 0.0
    %140 = vmatpush2.msra.mxu0 0.0
    %141 = vmatprep.subr.mxu0 0.0
    %142 = vmatpush2.msra.mxu0 0.0
    %143 = vmatprep.subr.mxu0 0.0
    %144 = vmatpush2.msra.mxu0 0.0
    %145 = vmatprep.subr.mxu0 0.0
    %146 = vmatpush2.msra.mxu0 0.0
    %147 = vmatprep.subr.mxu0 0.0
    %148 = vmatpush2.msra.mxu0 0.0
    %149 = vmatprep.subr.mxu0 0.0
    %150 = vmatpush2.msra.mxu0 0.0
    %151 = vmatprep.subr.mxu0 0.0
    %152 = vmatpush2.msra.mxu0 0.0
    %153 = vmatprep.subr.mxu0 0.0
    %154 = vmatpush2.msra.mxu0 0.0
    %155 = vmatprep.subr.mxu0 0.0
    %156 = vmatpush2.msra.mxu0 0.0
    %157 = vmatprep.subr.mxu0 0.0
    %158 = vmatpush2.msra.mxu0 0.0
    %159 = vmatprep.mubr.f32.mxu0 0.0
    %160 = vmatmul.mubr.f32.gmra.mxu0 %v70
    %v161 = vpop.f32.mrf.mxu0
    %v162 = vadd.f32 %v93, %v161
    %v163 = vpop.f32.mrf.mxu0
    %164 = vmatprep.mubr.f32.mxu0 0.0
    %165 = vmatmul.mubr.f32.gmra.mxu0 %v71
    %v166 = vpop.f32.mrf.mxu0
    %v167 = vadd.f32 %v93, %v166
    %v168 = vpop.f32.mrf.mxu0
    %169 = vdwg.mxu0
    %v170 = vmax.f32 %v162, 0.0
    %v171 = vmax.f32 %v167, 0.0
    %v172 = vld [vmem:[#allocation2] sm:$0xff]
    %v173 = vld [vmem:[#allocation2 + $0x8] sm:$0xff]
    %v174 = vld [vmem:[#allocation10] sm:$0xff]
    %v175 = vld [vmem:[#allocation10 + $0x8] sm:$0xff]
    %v176 = vld [vmem:[#allocation10 + $0x10] sm:$0xff]
    %v177 = vld [vmem:[#allocation10 + $0x18] sm:$0xff]
    %v178 = vld [vmem:[#allocation10 + $0x20] sm:$0xff]
    %v179 = vld [vmem:[#allocation10 + $0x28] sm:$0xff]
    %v180 = vld [vmem:[#allocation10 + $0x30] sm:$0xff]
    %v181 = vld [vmem:[#allocation10 + $0x38] sm:$0xff]
    %v182 = vld [vmem:[#allocation10 + $0x40] sm:$0xff]
    %v183 = vld [vmem:[#allocation10 + $0x48] sm:$0xff]
    %v184 = vld [vmem:[#allocation10 + $0x50] sm:$0xff]
    %v185 = vld [vmem:[#allocation10 + $0x58] sm:$0xff]
    %v186 = vld [vmem:[#allocation10 + $0x60] sm:$0xff]
    %v187 = vld [vmem:[#allocation10 + $0x68] sm:$0xff]
    %v188 = vld [vmem:[#allocation10 + $0x70] sm:$0xff]
    %v189 = vld [vmem:[#allocation10 + $0x78] sm:$0xff]
    %190 = vmatprep.subr.mxu0 0.0
    %191 = vmatpush1.msra.mxu0 %v189
    %192 = vmatprep.subr.mxu0 0.0
    %193 = vmatpush1.msra.mxu0 %v188
    %194 = vmatprep.subr.mxu0 0.0
    %195 = vmatpush1.msra.mxu0 %v187
    %196 = vmatprep.subr.mxu0 0.0
    %197 = vmatpush1.msra.mxu0 %v186
    %198 = vmatprep.subr.mxu0 0.0
    %199 = vmatpush1.msra.mxu0 %v185
    %200 = vmatprep.subr.mxu0 0.0
    %201 = vmatpush1.msra.mxu0 %v184
    %202 = vmatprep.subr.mxu0 0.0
    %203 = vmatpush1.msra.mxu0 %v183
    %204 = vmatprep.subr.mxu0 0.0
    %205 = vmatpush1.msra.mxu0 %v182
    %206 = vmatprep.subr.mxu0 0.0
    %207 = vmatpush1.msra.mxu0 %v181
    %208 = vmatprep.subr.mxu0 0.0
    %209 = vmatpush1.msra.mxu0 %v180
    %210 = vmatprep.subr.mxu0 0.0
    %211 = vmatpush1.msra.mxu0 %v179
    %212 = vmatprep.subr.mxu0 0.0
    %213 = vmatpush1.msra.mxu0 %v178
    %214 = vmatprep.subr.mxu0 0.0
    %215 = vmatpush1.msra.mxu0 %v177
    %216 = vmatprep.subr.mxu0 0.0
    %217 = vmatpush1.msra.mxu0 %v176
    %218 = vmatprep.subr.mxu0 0.0
    %219 = vmatpush1.msra.mxu0 %v175
    %220 = vmatprep.subr.mxu0 0.0
    %221 = vmatpush1.msra.mxu0 %v174
    %222 = vmatprep.subr.mxu0 0.0
    %223 = vmatpush2.msra.mxu0 0.0
    %224 = vmatprep.subr.mxu0 0.0
    %225 = vmatpush2.msra.mxu0 0.0
    %226 = vmatprep.subr.mxu0 0.0
    %227 = vmatpush2.msra.mxu0 0.0
    %228 = vmatprep.subr.mxu0 0.0
    %229 = vmatpush2.msra.mxu0 0.0
    %230 = vmatprep.subr.mxu0 0.0
    %231 = vmatpush2.msra.mxu0 0.0
    %232 = vmatprep.subr.mxu0 0.0
    %233 = vmatpush2.msra.mxu0 0.0
    %234 = vmatprep.subr.mxu0 0.0
    %235 = vmatpush2.msra.mxu0 0.0
    %236 = vmatprep.subr.mxu0 0.0
    %237 = vmatpush2.msra.mxu0 0.0
    %238 = vmatprep.subr.mxu0 0.0
    %239 = vmatpush2.msra.mxu0 0.0
    %240 = vmatprep.subr.mxu0 0.0
    %241 = vmatpush2.msra.mxu0 0.0
    %242 = vmatprep.subr.mxu0 0.0
    %243 = vmatpush2.msra.mxu0 0.0
    %244 = vmatprep.subr.mxu0 0.0
    %245 = vmatpush2.msra.mxu0 0.0
    %246 = vmatprep.subr.mxu0 0.0
    %247 = vmatpush2.msra.mxu0 0.0
    %248 = vmatprep.subr.mxu0 0.0
    %249 = vmatpush2.msra.mxu0 0.0
    %250 = vmatprep.subr.mxu0 0.0
    %251 = vmatpush2.msra.mxu0 0.0
    %252 = vmatprep.subr.mxu0 0.0
    %253 = vmatpush2.msra.mxu0 0.0
    %254 = vmatprep.mubr.f32.mxu0 0.0
    %255 = vmatmul.mubr.f32.gmra.mxu0 %v170
    %v256 = vpop.f32.mrf.mxu0
    %v257 = vadd.f32 0.0, %v256
    %v258 = vpop.f32.mrf.mxu0
    %259 = vmatprep.mubr.f32.mxu0 0.0
    %260 = vmatmul.mubr.f32.gmra.mxu0 %v171
    %v261 = vpop.f32.mrf.mxu0
    %v262 = vadd.f32 0.0, %v261
    %v263 = vpop.f32.mrf.mxu0
    %264 = vdwg.mxu0
    %v265 = vadd.f32 %v172, %v257
    %v266 = vadd.f32 %v173, %v262
    %267 = vst [vmem:[#allocation2] sm:$0xff] %v265
    %268 = vst [vmem:[#allocation2 + $0x8] sm:$0xff] %v266
    // Predicated region
    $region38: #{tpu_custom_call.1} parent=1 // pred_check
      %p269 = pneg %p64
    $region39: #{tpu_custom_call.1} parent=1 // pred_check_branch
      %271 = sbr.rel (%p269) target = $region41
    $region40: #{tpu_custom_call.1} parent=1 // pred_region
      %v272 = vld [vmem:[#allocation2] sm:$0xff]
      %v273 = vld [vmem:[#allocation2 + $0x8] sm:$0xff]
      %v274 = vld [vmem:[%s5] sm:$0x1]
      %v276 = vlaneseq
      %v277 = vshrl.u32 %v276, 7
      %v278 = vsub.s32 0, %v277
      %v279 = vrot.slane %v274, %v278
      %v281 = vadd.f32 %v272, %v279
      %v282 = vadd.f32 %v273, %v279
      %283 = vst [vmem:[#allocation11] sm:$0xff] %v281
      %284 = vst [vmem:[#allocation11 + $0x8] sm:$0xff] %v282
    $region41: #{tpu_custom_call.1} parent=1 // pred_fallthru
      _
    // Predicated region
    $region42: #{tpu_custom_call.1} parent=1 // pred_check
      _
    $region43: #{tpu_custom_call.1} parent=1 // pred_check_branch
      %286 = sbr.rel (0) target = $region45
    $region44: #{tpu_custom_call.1} parent=1 // pred_region
      %s288 = ssub.s32 256, 256
      %289 = vsyncadd [#allocation7], %s288
      %s290 = sshll.u32 [#allocation11], 4
      %s291 = int_to_ptr.vmem [resolvable:$true] %s290
      %296 = dma.vmem_to_hbm [thread:$0]  %s291, 256, %s6, [#allocation7], 128, 128, 8
    $region45: #{tpu_custom_call.1} parent=1 // pred_fallthru
      _
    // Predicated region
    $region46: #{tpu_custom_call.1} parent=1 // pred_check
      _
    $region47: #{tpu_custom_call.1} parent=1 // pred_check_branch
      %298 = sbr.rel (0) target = $region49
    $region48: #{tpu_custom_call.1} parent=1 // pred_region
      %299 = dma.done [#allocation7], 256
    $region49: #{tpu_custom_call.1} parent=1 // pred_fallthru
      _
    %300 = vsyncpa [#allocation6], 1
    %301 = vsyncpa [#allocation9], 1
    %302 = vsyncpa [#allocation7], 1

</llo_original>
